<compile_context>
chip_gen: v7x
topology: tpu7x:2x2x1
jax: 0.10.0
libtpu: 0.0.40
codegen_flags: <defaults>
</compile_context>

<pallas_src>
import jax
import jax.numpy as jnp
from jax import lax
from jax.experimental import pallas as pl
from jax.experimental.pallas import tpu as pltpu

NUM_GROUPS = 8
EPS = 1e-5
LANE = 128
LOG2E = 1.4426950408889634


def _device_kind():
    try:
        return jax.devices()[0].device_kind.lower()
    except Exception:
        return ""


def _use_bf16_exp():
    # bf16 EUP exists on v6e / v7x; keep the f32 exp path on v5e / unknown chips.
    kind = _device_kind()
    return ("v6" in kind) or ("v7" in kind)


def _vmem_limit_bytes():
    # v7x has only 64 MiB physical per TensorCore -> leave headroom for compiler scratch;
    # 64 MiB is fine on v5e / v6e (128 MiB physical).
    return (48 if "v7" in _device_kind() else 64) * 1024 * 1024


def _const_spec(shape):
    """BlockSpec for grid-invariant operands; single-buffered when supported
    (double-buffering a constant block is pure VMEM waste)."""
    index_map = lambda *_: (0,) * len(shape)
    try:
        return pl.BlockSpec(shape, index_map, pipeline_mode=pl.Buffered(1))
    except Exception:  # older JAX without pipeline_mode / pl.Buffered
        return pl.BlockSpec(shape, index_map)


def _pick_tile(n, candidates):
    for cand in candidates:
        if n > cand and n % cand == 0:
            return cand
    return n


# ---------------------------------------------------------------------------
# Kernel A: GroupNorm (pre-folded affine) + fused qkv projection.
# ---------------------------------------------------------------------------
def _qkv_kernel(x_ref, scale_ref, shift_ref, wqkv_ref, bqkv_ref, qkv_ref):
    x = x_ref[0]                                         # (TN, Cp) f32
    xn = x * scale_ref[0] + shift_ref[0]                 # GroupNorm, stats pre-folded
    qkv = jnp.dot(xn.astype(jnp.bfloat16), wqkv_ref[...],
                  preferred_element_type=jnp.float32) + bqkv_ref[...]
    qkv_ref[0] = qkv.astype(jnp.bfloat16)


# ---------------------------------------------------------------------------
# Kernel B: flash attention + out projection + residual.
# ---------------------------------------------------------------------------
def _make_attn_kernel(exp_bf16):
    def p_and_rowsum(s_minus_m):
        if exp_bf16:                                     # bf16 EUP (v6e/v7x)
            p = jnp.exp2(s_minus_m.astype(jnp.bfloat16))
            return p, jnp.sum(p, axis=-1, keepdims=True, dtype=jnp.float32)
        p32 = jnp.exp2(s_minus_m)                        # f32 EUP (v5e)
        return p32.astype(jnp.bfloat16), jnp.sum(p32, axis=-1, keepdims=True)

    def kernel(xres_ref, q_ref, k_ref, v_ref, wout_ref, bout_ref,
               o_ref, m_scr, l_scr, acc_scr):
        ki = pl.program_id(2)

        @pl.when(ki == 0)
        def _():
            m_scr[...] = jnp.full_like(m_scr, -jnp.inf)
            l_scr[...] = jnp.zeros_like(l_scr)
            acc_scr[...] = jnp.zeros_like(acc_scr)

        # q @ k^T without materializing a transpose of k (contract dim 1 of both).
        s = lax.dot_general(q_ref[0], k_ref[0],
                            dimension_numbers=(((1,), (1,)), ((), ())),
                            preferred_element_type=jnp.float32)      # (TQ, TKV)
        m_prev = m_scr[...]
        m_new = jnp.maximum(m_prev, jnp.max(s, axis=-1, keepdims=True))
        alpha = jnp.exp2(m_prev - m_new)                 # log2(e) folded into q scale
        p, row = p_and_rowsum(s - m_new)
        l_scr[...] = alpha * l_scr[...] + row
        acc_scr[...] = alpha * acc_scr[...] + jnp.dot(
            p, v_ref[0], preferred_element_type=jnp.float32)
        m_scr[...] = m_new

        @pl.when(ki == pl.num_programs(2) - 1)
        def _():
            attn = acc_scr[...] * pl.reciprocal(l_scr[...], approx=True)
            out = jnp.dot(attn.astype(jnp.bfloat16), wout_ref[...],
                          preferred_element_type=jnp.float32) + bout_ref[...]
            o_ref[0] = xres_ref[0] + out

    return kernel


def _make_attn_kernel_single_kv(exp_bf16):
    """num_kv == 1: plain softmax (no online-softmax carry, no scratch)."""
    def kernel(xres_ref, q_ref, k_ref, v_ref, wout_ref, bout_ref, o_ref):
        s = lax.dot_general(q_ref[0], k_ref[0],
                            dimension_numbers=(((1,), (1,)), ((), ())),
                            preferred_element_type=jnp.float32)      # (TQ, N)
        m = jnp.max(s, axis=-1, keepdims=True)
        if exp_bf16:
            p = jnp.exp2((s - m).astype(jnp.bfloat16))
            l = jnp.sum(p, axis=-1, keepdims=True, dtype=jnp.float32)
        else:
            p32 = jnp.exp2(s - m)
            l = jnp.sum(p32, axis=-1, keepdims=True)
            p = p32.astype(jnp.bfloat16)
        pv = jnp.dot(p, v_ref[0], preferred_element_type=jnp.float32)
        attn = pv * pl.reciprocal(l, approx=True)
        out = jnp.dot(attn.astype(jnp.bfloat16), wout_ref[...],
                      preferred_element_type=jnp.float32) + bout_ref[...]
        o_ref[0] = xres_ref[0] + out
    return kernel


# ---------------------------------------------------------------------------
# Wrapper
# ---------------------------------------------------------------------------
def attention_block_pallas(x_nchw, gamma, beta, wqkv_conv, bqkv, wout_conv, bout):
    """x_nchw: (B, C, H, W) f32.  PyTorch-shaped params:
    wqkv_conv (3C, C), bqkv (3C,), wout_conv (C, C), bout (C,)."""
    B, C, H, W = x_nchw.shape
    assert C % NUM_GROUPS == 0, "GroupNorm(8, C) requires C % 8 == 0"
    N = H * W
    assert N % 8 == 0, "H*W must be a multiple of 8 (TPU sublane tiling)"

    Cp = ((C + LANE - 1) // LANE) * LANE          # lane-pad channels to mult. of 128
    pad_c = Cp - C

    TN = _pick_tile(N, (512, 256, 128))           # qkv-projection row tile
    TQ = _pick_tile(N, (512, 256, 128))           # query tile (parallel grid axis)
    TKV = _pick_tile(N, (1024, 512, 256, 128))    # kv tile (streamed "arbitrary" axis)
    NQ, NKV = N // TQ, N // TKV

    exp_bf16 = _use_bf16_exp()
    vmem_limit = _vmem_limit_bytes()

    # ---- layout: NCHW -> (B, N, Cp) channels-last, zero-padded lanes ----
    x_bnc = jnp.transpose(x_nchw, (0, 2, 3, 1)).reshape(B, N, C)
    if pad_c:
        x_bnc = jnp.pad(x_bnc, ((0, 0), (0, 0), (0, pad_c)))

    # ---- GroupNorm stats precomputed here (cheap XLA reduction, mean-subtracted
    #      variance) and folded into per-(batch, channel) scale/shift. Padded lanes
    #      get scale=0 / shift=0 so they stay zero through the whole pipeline. ----
    Cg = C // NUM_GROUPS
    xg = x_nchw.reshape(B, NUM_GROUPS, Cg * H * W).astype(jnp.float32)
    mean = jnp.mean(xg, axis=-1)                                  # (B, G)
    rstd = lax.rsqrt(jnp.var(xg, axis=-1) + EPS)                  # biased var (PyTorch)
    mean_c = jnp.repeat(mean, Cg, axis=1)                         # (B, C)
    rstd_c = jnp.repeat(rstd, Cg, axis=1)
    gn_scale = gamma[None, :] * rstd_c
    gn_shift = beta[None, :] - mean_c * gn_scale

    def pad_bvec(v):                               # (B, C) -> (B, 1, Cp)
        v = v.reshape(B, 1, C)
        if pad_c:
            v = jnp.pad(v, ((0, 0), (0, 0), (0, pad_c)))
        return v.astype(jnp.float32)

    def pad_mat(w):                                # (C, C) -> (Cp, Cp)
        return jnp.pad(w, ((0, pad_c), (0, pad_c))) if pad_c else w

    def pad_vec(v):                                # (C,) -> (1, Cp)
        v = v.reshape(1, C)
        return (jnp.pad(v, ((0, 0), (0, pad_c))) if pad_c else v).astype(jnp.float32)

    # Attention scale (C**-0.5) and log2(e) (exp -> exp2) folded into the q projection.
    q_scale = (float(C) ** -0.5) * LOG2E
    w_qkv = jnp.concatenate([pad_mat(wqkv_conv[:C].T * q_scale),
                             pad_mat(wqkv_conv[C:2 * C].T),
                             pad_mat(wqkv_conv[2 * C:].T)],
                            axis=1).astype(jnp.bfloat16)          # (Cp, 3Cp)
    b_qkv = jnp.concatenate([pad_vec(bqkv[:C] * q_scale),
                             pad_vec(bqkv[C:2 * C]),
                             pad_vec(bqkv[2 * C:])], axis=1)      # (1, 3Cp) f32
    w_out = pad_mat(wout_conv.T).astype(jnp.bfloat16)
    b_out = pad_vec(bout)

    # ---- Kernel A: GroupNorm + fused qkv projection -> (B, N, 3Cp) bf16 ----
    # TODO(synk): for very small C (heavy lane padding) stack several batch rows per
    # grid step along the sublane axis to amortize DMA and the ~0.35us step overhead.
    qkv = pl.pallas_call(
        _qkv_kernel,
        out_shape=jax.ShapeDtypeStruct((B, N, 3 * Cp), jnp.bfloat16),
        grid_spec=pltpu.PrefetchScalarGridSpec(
            num_scalar_prefetch=0,
            grid=(B, N // TN),
            in_specs=[
                pl.BlockSpec((1, TN, Cp), lambda b, n: (b, n, 0)),   # x
                pl.BlockSpec((1, 1, Cp), lambda b, n: (b, 0, 0)),    # GN scale (per batch)
                pl.BlockSpec((1, 1, Cp), lambda b, n: (b, 0, 0)),    # GN shift (per batch)
                _const_spec((Cp, 3 * Cp)),                           # fused Wqkv^T
                _const_spec((1, 3 * Cp)),                            # fused bias
            ],
            out_specs=pl.BlockSpec((1, TN, 3 * Cp), lambda b, n: (b, n, 0)),
        ),
        compiler_params=pltpu.CompilerParams(
            dimension_semantics=("parallel", "parallel"),
            vmem_limit_bytes=vmem_limit,
        ),
    )(x_bnc, pad_bvec(gn_scale), pad_bvec(gn_shift), w_qkv, b_qkv)

    # ---- Kernel B: flash attention + out proj + residual ----
    # q/k/v are 128-aligned block-columns (0 / 1 / 2) of the fused qkv array.
    if NKV == 1:
        kernel = _make_attn_kernel_single_kv(exp_bf16)
        grid = (B, NQ)
        dims = ("parallel", "parallel")
        in_specs = [
            pl.BlockSpec((1, TQ, Cp), lambda b, qi: (b, qi, 0)),     # x (residual)
            pl.BlockSpec((1, TQ, Cp), lambda b, qi: (b, qi, 0)),     # q
            pl.BlockSpec((1, TKV, Cp), lambda b, qi: (b, 0, 1)),     # k (full seq)
            pl.BlockSpec((1, TKV, Cp), lambda b, qi: (b, 0, 2)),     # v (full seq)
            _const_spec((Cp, Cp)),                                   # Wout^T
            _const_spec((1, Cp)),                                    # bout
        ]
        out_spec = pl.BlockSpec((1, TQ, Cp), lambda b, qi: (b, qi, 0))
        scratch = []
    else:
        kernel = _make_attn_kernel(exp_bf16)
        grid = (B, NQ, NKV)
        dims = ("parallel", "parallel", "arbitrary")
        in_specs = [
            pl.BlockSpec((1, TQ, Cp), lambda b, qi, ki: (b, qi, 0)),
            pl.BlockSpec((1, TQ, Cp), lambda b, qi, ki: (b, qi, 0)),
            pl.BlockSpec((1, TKV, Cp), lambda b, qi, ki: (b, ki, 1)),
            pl.BlockSpec((1, TKV, Cp), lambda b, qi, ki: (b, ki, 2)),
            _const_spec((Cp, Cp)),
            _const_spec((1, Cp)),
        ]
        out_spec = pl.BlockSpec((1, TQ, Cp), lambda b, qi, ki: (b, qi, 0))
        scratch = [pltpu.VMEM((TQ, 1), jnp.float32),     # m (running max)
                   pltpu.VMEM((TQ, 1), jnp.float32),     # l (running denom)
                   pltpu.VMEM((TQ, Cp), jnp.float32)]    # acc

    out_bnc = pl.pallas_call(
        kernel,
        out_shape=jax.ShapeDtypeStruct((B, N, Cp), jnp.float32),
        grid_spec=pltpu.PrefetchScalarGridSpec(
            num_scalar_prefetch=0,
            grid=grid,
            in_specs=in_specs,
            out_specs=out_spec,
            scratch_shapes=scratch,
        ),
        compiler_params=pltpu.CompilerParams(
            dimension_semantics=dims,
            vmem_limit_bytes=vmem_limit,
        ),
    )(x_bnc, qkv, qkv, qkv, w_out, b_out)

    out = out_bnc[:, :, :C].reshape(B, H, W, C)
    return jnp.transpose(out, (0, 3, 1, 2))


def attention_block_ref(x, gamma, beta, wqkv, bqkv, wout, bout):
    """Pure-JAX f32 reference mirroring the PyTorch forward."""
    B, C, H, W = x.shape
    Cg = C // NUM_GROUPS
    xg = x.reshape(B, NUM_GROUPS, Cg, H, W)
    mean = xg.mean(axis=(2, 3, 4), keepdims=True)
    var = xg.var(axis=(2, 3, 4), keepdims=True)
    xn = (xg - mean) / jnp.sqrt(var + EPS)
    xn = xn.reshape(B, C, H, W) * gamma[None, :, None, None] + beta[None, :, None, None]
    x_ = xn.reshape(B, C, H * W)
    qkv = jnp.einsum('oc,bcn->bon', wqkv, x_) + bqkv[None, :, None]
    q, k, v = jnp.split(qkv, 3, axis=1)
    attn = jnp.einsum('bci,bcj->bij', q, k) * (C ** -0.5)
    attn = jax.nn.softmax(attn, axis=-1)
    out = jnp.einsum('bij,bcj->bci', attn, v)
    out = jnp.einsum('oc,bcn->bon', wout, out) + bout[None, :, None]
    return x + out.reshape(B, C, H, W)


if __name__ == "__main__":
    def run_case(key, B, C, H, W):
        kx, kg, kb, kw1, kb1, kw2, kb2 = jax.random.split(key, 7)
        x = jax.random.normal(kx, (B, C, H, W), dtype=jnp.float32)
        gamma = 1.0 + 0.1 * jax.random.normal(kg, (C,), dtype=jnp.float32)
        beta = 0.1 * jax.random.normal(kb, (C,), dtype=jnp.float32)
        wqkv = 0.2 * jax.random.normal(kw1, (3 * C, C), dtype=jnp.float32)
        bqkv = 0.1 * jax.random.normal(kb1, (3 * C,), dtype=jnp.float32)
        wout = 0.2 * jax.random.normal(kw2, (C, C), dtype=jnp.float32)
        bout = 0.1 * jax.random.normal(kb2, (C,), dtype=jnp.float32)

        y = jax.block_until_ready(
            attention_block_pallas(x, gamma, beta, wqkv, bqkv, wout, bout))
        y_ref = attention_block_ref(x, gamma, beta, wqkv, bqkv, wout, bout)
        assert y.shape == (B, C, H, W)
        # bf16 MXU operands (f32 accumulation) -> compare to the f32 reference
        # with a bf16-level tolerance; still catches structural errors.
        assert jnp.allclose(y, y_ref, atol=5e-2, rtol=5e-2), (
            f"mismatch vs reference (max abs err {jnp.max(jnp.abs(y - y_ref))})")

    key = jax.random.PRNGKey(0)
    k1, k2 = jax.random.split(key)
    run_case(k1, 2, 32, 8, 8)      # N=64: single-KV-tile path (plain softmax)
    run_case(k2, 1, 32, 32, 32)    # N=1024: Q-tiled + KV-streamed flash path
    print("KERNEL_OK")
</pallas_src>

<mosaic_0001>
module attributes {stable_mosaic.version = 11 : i64} {
  func.func @_qkv_kernel(%arg0: i32, %arg1: i32, %arg2: memref<1x64x128xf32, #tpu.memory_space<vmem>>, %arg3: memref<1x1x128xf32, #tpu.memory_space<vmem>>, %arg4: memref<1x1x128xf32, #tpu.memory_space<vmem>>, %arg5: memref<128x384xbf16, #tpu.memory_space<vmem>>, %arg6: memref<1x384xf32, #tpu.memory_space<vmem>>, %arg7: memref<1x64x384xbf16, #tpu.memory_space<vmem>>) attributes {dimension_semantics = [#tpu.dimension_semantics<parallel>, #tpu.dimension_semantics<parallel>], iteration_bounds = array<i64: 2, 1>, scalar_prefetch = 0 : i64, scratch_operands = 0 : i64, tpu.core_type = #tpu.core_type<tc>, window_params = [{transform_indices = @transform_0, window_bounds = array<i64: 1, 64, 128>}, {transform_indices = @transform_1, window_bounds = array<i64: 1, 1, 128>}, {transform_indices = @transform_2, window_bounds = array<i64: 1, 1, 128>}, {pipeline_mode = #tpu.pipeline_mode<synchronous>, transform_indices = @transform_3, window_bounds = array<i64: 128, 384>}, {pipeline_mode = #tpu.pipeline_mode<synchronous>, transform_indices = @transform_4, window_bounds = array<i64: 1, 384>}, {transform_indices = @transform_5, window_bounds = array<i64: 1, 64, 384>}]} {
    %c0 = arith.constant 0 : index
    %c0_0 = arith.constant 0 : index
    %c0_1 = arith.constant 0 : index
    %0 = vector.load %arg2[%c0, %c0_0, %c0_1] : memref<1x64x128xf32, #tpu.memory_space<vmem>>, vector<1x64x128xf32>
    %1 = vector.shape_cast %0 : vector<1x64x128xf32> to vector<64x128xf32>
    %c0_2 = arith.constant 0 : index
    %c0_3 = arith.constant 0 : index
    %c0_4 = arith.constant 0 : index
    %2 = vector.load %arg3[%c0_2, %c0_3, %c0_4] : memref<1x1x128xf32, #tpu.memory_space<vmem>>, vector<1x1x128xf32>
    %3 = vector.shape_cast %2 : vector<1x1x128xf32> to vector<1x128xf32>
    %4 = vector.broadcast %3 : vector<1x128xf32> to vector<64x128xf32>
    %5 = arith.mulf %1, %4 : vector<64x128xf32>
    %c0_5 = arith.constant 0 : index
    %c0_6 = arith.constant 0 : index
    %c0_7 = arith.constant 0 : index
    %6 = vector.load %arg4[%c0_5, %c0_6, %c0_7] : memref<1x1x128xf32, #tpu.memory_space<vmem>>, vector<1x1x128xf32>
    %7 = vector.shape_cast %6 : vector<1x1x128xf32> to vector<1x128xf32>
    %8 = vector.broadcast %7 : vector<1x128xf32> to vector<64x128xf32>
    %9 = arith.addf %5, %8 : vector<64x128xf32>
    %10 = arith.truncf %9 : vector<64x128xf32> to vector<64x128xbf16>
    %c0_8 = arith.constant 0 : index
    %c0_9 = arith.constant 0 : index
    %11 = vector.load %arg5[%c0_8, %c0_9] : memref<128x384xbf16, #tpu.memory_space<vmem>>, vector<128x384xbf16>
    %cst = arith.constant dense<0.000000e+00> : vector<64x384xf32>
    %12 = tpu.matmul %10, %11, %cst {dimension_numbers = #tpu.dot_dimension_numbers<[1], [0], [0], [1], [0, 0, 1, 1], [], []>} : vector<64x128xbf16>, vector<128x384xbf16>, vector<64x384xf32> -> vector<64x384xf32>
    %c0_10 = arith.constant 0 : index
    %c0_11 = arith.constant 0 : index
    %13 = vector.load %arg6[%c0_10, %c0_11] : memref<1x384xf32, #tpu.memory_space<vmem>>, vector<1x384xf32>
    %14 = vector.broadcast %13 : vector<1x384xf32> to vector<64x384xf32>
    %15 = arith.addf %12, %14 : vector<64x384xf32>
    %16 = arith.truncf %15 : vector<64x384xf32> to vector<64x384xbf16>
    %c0_12 = arith.constant 0 : index
    %c0_13 = arith.constant 0 : index
    %c0_14 = arith.constant 0 : index
    %17 = vector.load %arg7[%c0_12, %c0_13, %c0_14] : memref<1x64x384xbf16, #tpu.memory_space<vmem>>, vector<1x64x384xbf16>
    %18 = vector.shape_cast %17 : vector<1x64x384xbf16> to vector<64x384xbf16>
    %19 = vector.shape_cast %16 : vector<64x384xbf16> to vector<1x64x384xbf16>
    tpu.vector_store %arg7[%c0_12, %c0_13, %c0_14], %19 {strides = array<i32>} : memref<1x64x384xbf16, #tpu.memory_space<vmem>>, vector<1x64x384xbf16>,
    return
  }
  func.func @transform_0(%arg0: i32, %arg1: i32) -> (i32, i32, i32) {
    %c0_i32 = arith.constant 0 : i32
    %c0_i32_0 = arith.constant 0 : i32
    return %arg0, %arg1, %c0_i32 : i32, i32, i32
  }
  func.func @transform_1(%arg0: i32, %arg1: i32) -> (i32, i32, i32) {
    %c0_i32 = arith.constant 0 : i32
    %c0_i32_0 = arith.constant 0 : i32
    %c0_i32_1 = arith.constant 0 : i32
    return %arg0, %c0_i32, %c0_i32_0 : i32, i32, i32
  }
  func.func @transform_2(%arg0: i32, %arg1: i32) -> (i32, i32, i32) {
    %c0_i32 = arith.constant 0 : i32
    %c0_i32_0 = arith.constant 0 : i32
    %c0_i32_1 = arith.constant 0 : i32
    return %arg0, %c0_i32, %c0_i32_0 : i32, i32, i32
  }
  func.func @transform_3(%arg0: i32, %arg1: i32) -> (i32, i32) {
    %c0_i32 = arith.constant 0 : i32
    %c0_i32_0 = arith.constant 0 : i32
    %c0_i32_1 = arith.constant 0 : i32
    return %c0_i32, %c0_i32_0 : i32, i32
  }
  func.func @transform_4(%arg0: i32, %arg1: i32) -> (i32, i32) {
    %c0_i32 = arith.constant 0 : i32
    %c0_i32_0 = arith.constant 0 : i32
    %c0_i32_1 = arith.constant 0 : i32
    return %c0_i32, %c0_i32_0 : i32, i32
  }
  func.func @transform_5(%arg0: i32, %arg1: i32) -> (i32, i32, i32) {
    %c0_i32 = arith.constant 0 : i32
    %c0_i32_0 = arith.constant 0 : i32
    return %arg0, %arg1, %c0_i32 : i32, i32, i32
  }
}

</mosaic_0001>

<llo_original>
// kernel: tpu_custom_call.1
$region0: #{tpu_custom_call.1}
  #allocation0 [shape = 'u32[]', space=smem, size = 0x4, offset = 0x4, fixed_abs, tag = 'smem constant byte address 0x4 - core index']
  #allocation1 [shape = 'u32[144,128]{1,0:T(1,128)}', space=vmem, size = 0x12000, scoped, tag = 'internal scratch']
  %s0 = inlined_call_operand.hbm [shape: f32[2,64,128], index: 0, kind: input, shape index: {}]
  %s1 = inlined_call_operand.hbm [shape: f32[2,1,128], index: 1, kind: input, shape index: {}]
  %s2 = inlined_call_operand.hbm [shape: f32[2,1,128], index: 2, kind: input, shape index: {}]
  %s3 = inlined_call_operand.hbm [shape: bf16[128,384], index: 3, kind: input, shape index: {}]
  %s4 = inlined_call_operand.hbm [shape: f32[1,384], index: 4, kind: input, shape index: {}]
  %s5 = inlined_call_operand.hbm [shape: bf16[2,64,384], index: 5, kind: output, shape index: {}]
  %s6 = sld [smem:[#allocation0]]
  $region73: #{tpu_custom_call.1} parent=0
    _
  %s8 = ssub.s32 1, %s6
  %s9 = scalar_select 0, %s8, %s6
  $region1: #{tpu_custom_call.1} parent=0
    #allocation2 [shape = 'u8[65536]{0}', space=vmem, size = 0x10000, scoped, tag = 'input window, operand 0']
    #allocation3 [shape = 's32[2]{0}', space=sflag, size = 0x8, scoped, tag = 'scoped memory for tpu_custom_call.1']
    #allocation4 [shape = 's32[2]{0}', space=sflag, size = 0x8, scoped, tag = 'scoped memory for tpu_custom_call.1']
    #allocation5 [shape = 'u8[1024]{0}', space=vmem, size = 0x400, scoped, tag = 'input window, operand 1']
    #allocation6 [shape = 's32[2]{0}', space=sflag, size = 0x8, scoped, tag = 'scoped memory for tpu_custom_call.1']
    #allocation7 [shape = 'u8[1024]{0}', space=vmem, size = 0x400, scoped, tag = 'input window, operand 2']
    #allocation8 [shape = 'u8[98304]{0}', space=vmem, size = 0x18000, scoped, tag = 'input window, operand 3, single buffered']
    #allocation9 [shape = 's32[1]{0}', space=sflag, size = 0x4, scoped, tag = 'scoped memory for tpu_custom_call.1']
    #allocation10 [shape = 'u8[1536]{0}', space=vmem, size = 0x800, scoped, tag = 'input window, operand 4, single buffered']
    #allocation11 [shape = 'u8[98304]{0}', space=vmem, size = 0x18000, scoped, tag = 'output window, operand 0']
    %10 = vsyncpa [#allocation3], 0
    %s11 = scalar_lea.sflag [#allocation3], 1
    %12 = vsyncpa %s11, 0
    %13 = vsyncpa [#allocation6], 0
    %s14 = scalar_lea.sflag [#allocation6], 1
    %15 = vsyncpa %s14, 0
    %16 = vsyncpa [#allocation9], 0
    %17 = vsyncpa [#allocation4], 0
    %s18 = scalar_lea.sflag [#allocation4], 1
    %19 = vsyncpa %s18, 0
    loop: start=0, step=1, limit=4
    $region2: #{tpu_custom_call.1} parent=1 // loop_pre_header
      _
    $region3: #{tpu_custom_call.1} parent=1 // loop_header
      %s21 = sphi 0, %s25
      %p22 = scmp.ge.s32.totalorder %s21, 4
      %s28 = sphi 0, %s40
      %s29 = sphi 0, %s36
      %s30 = sphi 0, %s28
      %s31 = sphi 0, %s29
      %s32 = sphi 0, %s30
      %s33 = sphi 0, %s31
      %s45 = sphi 0, %s47
      %s48 = sphi 0, %s45
      %s49 = sphi 0, %s48
      %s65 = sphi 0, %s49
      %s71 = sphi 0, %s73
      %s74 = sphi 0, %s71
      %s75 = sphi 0, %s74
      %s91 = sphi 0, %s75
      %s97 = sphi 0, %s99
      %s100 = sphi 0, %s97
      %s101 = sphi 0, %s100
      %s117 = sphi 0, %s101
      %s121 = sphi 0, %s121
      %s123 = sphi 0, %s121
      %s124 = sphi 0, %s123
      %s138 = sphi 0, %s124
      %s142 = sphi 0, %s142
      %s144 = sphi 0, %s142
      %s145 = sphi 0, %s144
      %s159 = sphi 0, %s145
      %s167 = sphi 0, %s169
      %s170 = sphi 0, %s167
      %s171 = sphi 0, %s170
      %s187 = sphi 0, %s171
    $region4: #{tpu_custom_call.1} parent=1 // loop_header_branch
      %24 = sbr.rel (%p22) target = $region8
    $region5: #{tpu_custom_call.1} parent=1 // loop_body
      %s26 = ssub.s32 %s21, 1
      %s27 = ssub.s32 %s21, 2
      %s34 = sadd.s32 1, %s29
      %p35 = scmp.ge.s32.totalorder %s34, 1
      %s36 = scalar_select %p35, 0, %s34
      %s37 = sadd.s32 1, %s28
      %s38 = scalar_select %p35, %s37, %s28
      %p39 = scmp.ge.s32.totalorder %s38, 2
      %s40 = scalar_select %p39, 0, %s38
      %s41 = ssub.s32 %s28, %s40
      %s42 = ssub.s32 %s29, %s36
      %s43 = sor.u32 %s41, %s42
      %p44 = scmp.eq.s32.totalorder %s43, 0
      %s46 = sadd.s32 %s45, 1
      %s47 = scalar_select %p44, %s45, %s46
      %p50 = pneg %p44
      %p51 = scmp.eq.s32.totalorder %s21, 1
      %p52 = por %p50, %p51
      %p53 = scmp.ne.s32.totalorder %s45, %s48
      %p54 = scmp.eq.s32.totalorder %s21, 0
      %p55 = por %p53, %p54
      %p56 = scmp.ne.s32.totalorder %s45, %s48
      %p57 = scmp.eq.s32.totalorder %s26, 1
      %p58 = por %p56, %p57
      %p59 = scmp.ne.s32.totalorder %s48, %s49
      %p60 = scmp.eq.s32.totalorder %s26, 0
      %p61 = por %p59, %p60
      %p62 = scmp.ne.s32.totalorder %s48, %s49
      %p63 = scmp.eq.s32.totalorder %s27, 1
      %p64 = por %p62, %p63
      %p66 = scmp.ne.s32.totalorder %s49, %s65
      %p67 = scmp.eq.s32.totalorder %s27, 0
      %p68 = por %p66, %p67
      %s69 = ssub.s32 %s28, %s40
      %p70 = scmp.eq.s32.totalorder %s69, 0
      %s72 = sadd.s32 %s71, 1
      %s73 = scalar_select %p70, %s71, %s72
      %p76 = pneg %p70
      %p77 = scmp.eq.s32.totalorder %s21, 1
      %p78 = por %p76, %p77
      %p79 = scmp.ne.s32.totalorder %s71, %s74
      %p80 = scmp.eq.s32.totalorder %s21, 0
      %p81 = por %p79, %p80
      %p82 = scmp.ne.s32.totalorder %s71, %s74
      %p83 = scmp.eq.s32.totalorder %s26, 1
      %p84 = por %p82, %p83
      %p85 = scmp.ne.s32.totalorder %s74, %s75
      %p86 = scmp.eq.s32.totalorder %s26, 0
      %p87 = por %p85, %p86
      %p88 = scmp.ne.s32.totalorder %s74, %s75
      %p89 = scmp.eq.s32.totalorder %s27, 1
      %p90 = por %p88, %p89
      %p92 = scmp.ne.s32.totalorder %s75, %s91
      %p93 = scmp.eq.s32.totalorder %s27, 0
      %p94 = por %p92, %p93
      %s95 = ssub.s32 %s28, %s40
      %p96 = scmp.eq.s32.totalorder %s95, 0
      %s98 = sadd.s32 %s97, 1
      %s99 = scalar_select %p96, %s97, %s98
      %p102 = pneg %p96
      %p103 = scmp.eq.s32.totalorder %s21, 1
      %p104 = por %p102, %p103
      %p105 = scmp.ne.s32.totalorder %s97, %s100
      %p106 = scmp.eq.s32.totalorder %s21, 0
      %p107 = por %p105, %p106
      %p108 = scmp.ne.s32.totalorder %s97, %s100
      %p109 = scmp.eq.s32.totalorder %s26, 1
      %p110 = por %p108, %p109
      %p111 = scmp.ne.s32.totalorder %s100, %s101
      %p112 = scmp.eq.s32.totalorder %s26, 0
      %p113 = por %p111, %p112
      %p114 = scmp.ne.s32.totalorder %s100, %s101
      %p115 = scmp.eq.s32.totalorder %s27, 1
      %p116 = por %p114, %p115
      %p118 = scmp.ne.s32.totalorder %s101, %s117
      %p119 = scmp.eq.s32.totalorder %s27, 0
      %p120 = por %p118, %p119
      %s122 = sadd.s32 %s121, 1
      %p125 = scmp.eq.s32.totalorder %s21, 1
      %p126 = scmp.ne.s32.totalorder %s121, %s123
      %p127 = scmp.eq.s32.totalorder %s21, 0
      %p128 = por %p126, %p127
      %p129 = scmp.ne.s32.totalorder %s121, %s123
      %p130 = scmp.eq.s32.totalorder %s26, 1
      %p131 = por %p129, %p130
      %p132 = scmp.ne.s32.totalorder %s123, %s124
      %p133 = scmp.eq.s32.totalorder %s26, 0
      %p134 = por %p132, %p133
      %p135 = scmp.ne.s32.totalorder %s123, %s124
      %p136 = scmp.eq.s32.totalorder %s27, 1
      %p137 = por %p135, %p136
      %p139 = scmp.ne.s32.totalorder %s124, %s138
      %p140 = scmp.eq.s32.totalorder %s27, 0
      %p141 = por %p139, %p140
      %s143 = sadd.s32 %s142, 1
      %p146 = scmp.eq.s32.totalorder %s21, 1
      %p147 = scmp.ne.s32.totalorder %s142, %s144
      %p148 = scmp.eq.s32.totalorder %s21, 0
      %p149 = por %p147, %p148
      %p150 = scmp.ne.s32.totalorder %s142, %s144
      %p151 = scmp.eq.s32.totalorder %s26, 1
      %p152 = por %p150, %p151
      %p153 = scmp.ne.s32.totalorder %s144, %s145
      %p154 = scmp.eq.s32.totalorder %s26, 0
      %p155 = por %p153, %p154
      %p156 = scmp.ne.s32.totalorder %s144, %s145
      %p157 = scmp.eq.s32.totalorder %s27, 1
      %p158 = por %p156, %p157
      %p160 = scmp.ne.s32.totalorder %s145, %s159
      %p161 = scmp.eq.s32.totalorder %s27, 0
      %p162 = por %p160, %p161
      %s163 = ssub.s32 %s28, %s40
      %s164 = ssub.s32 %s29, %s36
      %s165 = sor.u32 %s163, %s164
      %p166 = scmp.eq.s32.totalorder %s165, 0
      %s168 = sadd.s32 %s167, 1
      %s169 = scalar_select %p166, %s167, %s168
      %p172 = pneg %p166
      %p173 = scmp.eq.s32.totalorder %s21, 1
      %p174 = por %p172, %p173
      %p175 = scmp.ne.s32.totalorder %s167, %s170
      %p176 = scmp.eq.s32.totalorder %s21, 0
      %p177 = por %p175, %p176
      %p178 = scmp.ne.s32.totalorder %s167, %s170
      %p179 = scmp.eq.s32.totalorder %s26, 1
      %p180 = por %p178, %p179
      %p181 = scmp.ne.s32.totalorder %s170, %s171
      %p182 = scmp.eq.s32.totalorder %s26, 0
      %p183 = por %p181, %p182
      %p184 = scmp.ne.s32.totalorder %s170, %s171
      %p185 = scmp.eq.s32.totalorder %s27, 1
      %p186 = por %p184, %p185
      %p188 = scmp.ne.s32.totalorder %s171, %s187
      %p189 = scmp.eq.s32.totalorder %s27, 0
      %p190 = por %p188, %p189
      %p191 = scmp.le.s32.totalorder 1, %s21
      %p192 = scmp.lt.s32.totalorder %s21, 3
      %p193 = pnand %p191, %p192
      %p194 = pneg %p193
      // Predicated region
      $region9: #{tpu_custom_call.1} parent=5 // pred_check
        _
      $region10: #{tpu_custom_call.1} parent=5 // pred_check_branch
        %196 = sbr.rel (%p193) target = $region12
      $region11: #{tpu_custom_call.1} parent=5 // pred_region
        %s197 = ssub.s32 %s21, 1
        // Predicated region
        $region13: #{tpu_custom_call.1} parent=11 // pred_check
          %p198 = pneg %p134
        $region14: #{tpu_custom_call.1} parent=11 // pred_check_branch
          %200 = sbr.rel (%p198) target = $region16
        $region15: #{tpu_custom_call.1} parent=11 // pred_region
          %s202 = ssub.s32 3072, 3072
          %203 = vsyncadd [#allocation9], %s202
          %s204 = sshll.u32 [#allocation8], 4
          %s205 = int_to_ptr.vmem [resolvable:$true] %s204
          %210 = dma.hbm_to_vmem [thread:$0]  %s3, 3072, %s205, [#allocation9], 192, 192, 12
        $region16: #{tpu_custom_call.1} parent=11 // pred_fallthru
          _
        // Predicated region
        $region17: #{tpu_custom_call.1} parent=11 // pred_check
          %p211 = pneg %p155
        $region18: #{tpu_custom_call.1} parent=11 // pred_check_branch
          %213 = sbr.rel (%p211) target = $region20
        $region19: #{tpu_custom_call.1} parent=11 // pred_region
          %s215 = ssub.s32 48, 48
          %216 = vsyncadd [#allocation9], %s215
          %s218 = sshll.u32 [#allocation10], 4
          %s219 = int_to_ptr.vmem [resolvable:$true] %s218
          %221 = dma.hbm_to_vmem [thread:$0]  %s4, 48, %s219, [#allocation9]
        $region20: #{tpu_custom_call.1} parent=11 // pred_fallthru
          _
      $region12: #{tpu_custom_call.1} parent=5 // pred_fallthru
        _
      %p222 = scmp.lt.s32.totalorder %s21, 2
      // Predicated region
      $region21: #{tpu_custom_call.1} parent=5 // pred_check
        %p223 = pneg %p222
      $region22: #{tpu_custom_call.1} parent=5 // pred_check_branch
        %225 = sbr.rel (%p223) target = $region24
      $region23: #{tpu_custom_call.1} parent=5 // pred_region
        // Predicated region
        $region25: #{tpu_custom_call.1} parent=23 // pred_check
          %p226 = pneg %p55
        $region26: #{tpu_custom_call.1} parent=23 // pred_check_branch
          %228 = sbr.rel (%p226) target = $region28
        $region27: #{tpu_custom_call.1} parent=23 // pred_region
          %s229 = sand.u32 %s45, 1
          %s230 = scalar_lea.sflag [#allocation3], %s229
          %s231 = sand.u32 %s45, 1
          %s232 = smul.addr %s231, 64
          %s233 = scalar_lea.vmem [#allocation2], %s232
          %s234 = smul.u32 8, %s29
          %s236 = ssub.s32 1024, 1024
          %237 = vsyncadd %s230, %s236
          %s238 = smul.addr %s28, 8
          %s239 = sadd.s32 %s234, %s238
          %s240 = smul.addr %s239, 128
          %s241 = scalar_lea.hbm %s0, %s240
          %s242 = sshll.u32 %s233, 4
          %s243 = int_to_ptr.vmem [resolvable:$true] %s242
          %248 = dma.hbm_to_vmem [thread:$0]  %s241, 1024, %s243, %s230, 128, 128, 8
        $region28: #{tpu_custom_call.1} parent=23 // pred_fallthru
          _
        // Predicated region
        $region29: #{tpu_custom_call.1} parent=23 // pred_check
          %p249 = pneg %p81
        $region30: #{tpu_custom_call.1} parent=23 // pred_check_branch
          %251 = sbr.rel (%p249) target = $region32
        $region31: #{tpu_custom_call.1} parent=23 // pred_region
          %s252 = sand.u32 %s21, 1
          %s253 = scalar_lea.sflag [#allocation6], %s252
          %s254 = sand.u32 %s71, 1
          %s255 = scalar_lea.vmem [#allocation5], %s254
          %s257 = ssub.s32 16, 16
          %258 = vsyncadd %s253, %s257
          %s259 = smul.addr %s28, 16
          %s260 = scalar_lea.hbm %s1, %s259
          %s262 = sshll.u32 %s255, 4
          %s263 = int_to_ptr.vmem [resolvable:$true] %s262
          %265 = dma.hbm_to_vmem [thread:$0]  %s260, 16, %s263, %s253
        $region32: #{tpu_custom_call.1} parent=23 // pred_fallthru
          _
        // Predicated region
        $region33: #{tpu_custom_call.1} parent=23 // pred_check
          %p266 = pneg %p107
        $region34: #{tpu_custom_call.1} parent=23 // pred_check_branch
          %268 = sbr.rel (%p266) target = $region36
        $region35: #{tpu_custom_call.1} parent=23 // pred_region
          %s269 = sand.u32 %s21, 1
          %s270 = scalar_lea.sflag [#allocation6], %s269
          %s271 = sand.u32 %s97, 1
          %s272 = scalar_lea.vmem [#allocation7], %s271
          %s274 = ssub.s32 16, 16
          %275 = vsyncadd %s270, %s274
          %s276 = smul.addr %s28, 16
          %s277 = scalar_lea.hbm %s2, %s276
          %s279 = sshll.u32 %s272, 4
          %s280 = int_to_ptr.vmem [resolvable:$true] %s279
          %282 = dma.hbm_to_vmem [thread:$0]  %s277, 16, %s280, %s270
        $region36: #{tpu_custom_call.1} parent=23 // pred_fallthru
          _
      $region24: #{tpu_custom_call.1} parent=5 // pred_fallthru
        _
      %p283 = scmp.le.s32.totalorder 1, %s21
      %p284 = scmp.lt.s32.totalorder %s21, 3
      %p285 = pnand %p283, %p284
      %p286 = pneg %p285
      // Predicated region
      $region37: #{tpu_custom_call.1} parent=5 // pred_check
        _
      $region38: #{tpu_custom_call.1} parent=5 // pred_check_branch
        %288 = sbr.rel (%p285) target = $region40
      $region39: #{tpu_custom_call.1} parent=5 // pred_region
        %s289 = ssub.s32 %s21, 1
        %s290 = sand.u32 %s48, 1
        %s291 = scalar_lea.sflag [#allocation3], %s290
        %s292 = sand.u32 %s48, 1
        %s293 = smul.addr %s292, 64
        %s294 = scalar_lea.vmem [#allocation2], %s293
        // Predicated region
        $region41: #{tpu_custom_call.1} parent=39 // pred_check
          %p295 = pneg %p61
        $region42: #{tpu_custom_call.1} parent=39 // pred_check_branch
          %297 = sbr.rel (%p295) target = $region44
        $region43: #{tpu_custom_call.1} parent=39 // pred_region
          %298 = dma.done %s291, 1024
        $region44: #{tpu_custom_call.1} parent=39 // pred_fallthru
          _
        %s299 = sand.u32 %s26, 1
        %s300 = scalar_lea.sflag [#allocation6], %s299
        %s301 = sand.u32 %s74, 1
        %s302 = scalar_lea.vmem [#allocation5], %s301
        // Predicated region
        $region45: #{tpu_custom_call.1} parent=39 // pred_check
          %p303 = pneg %p87
        $region46: #{tpu_custom_call.1} parent=39 // pred_check_branch
          %305 = sbr.rel (%p303) target = $region48
        $region47: #{tpu_custom_call.1} parent=39 // pred_region
          %306 = dma.done %s300, 16
        $region48: #{tpu_custom_call.1} parent=39 // pred_fallthru
          _
        %s307 = sand.u32 %s26, 1
        %s308 = scalar_lea.sflag [#allocation6], %s307
        %s309 = sand.u32 %s100, 1
        %s310 = scalar_lea.vmem [#allocation7], %s309
        // Predicated region
        $region49: #{tpu_custom_call.1} parent=39 // pred_check
          %p311 = pneg %p113
        $region50: #{tpu_custom_call.1} parent=39 // pred_check_branch
          %313 = sbr.rel (%p311) target = $region52
        $region51: #{tpu_custom_call.1} parent=39 // pred_region
          %314 = dma.done %s308, 16
        $region52: #{tpu_custom_call.1} parent=39 // pred_fallthru
          _
        // Predicated region
        $region53: #{tpu_custom_call.1} parent=39 // pred_check
          %p315 = pneg %p134
        $region54: #{tpu_custom_call.1} parent=39 // pred_check_branch
          %317 = sbr.rel (%p315) target = $region56
        $region55: #{tpu_custom_call.1} parent=39 // pred_region
          %318 = dma.done [#allocation9], 3072
        $region56: #{tpu_custom_call.1} parent=39 // pred_fallthru
          _
        // Predicated region
        $region57: #{tpu_custom_call.1} parent=39 // pred_check
          %p319 = pneg %p155
        $region58: #{tpu_custom_call.1} parent=39 // pred_check_branch
          %321 = sbr.rel (%p319) target = $region60
        $region59: #{tpu_custom_call.1} parent=39 // pred_region
          %322 = dma.done [#allocation9], 48
        $region60: #{tpu_custom_call.1} parent=39 // pred_fallthru
          _
        %s323 = sand.u32 %s48, 1
        %s324 = scalar_lea.sflag [#allocation3], %s323
        %s325 = sand.u32 %s48, 1
        %s326 = smul.addr %s325, 64
        %s327 = scalar_lea.vmem [#allocation2], %s326
        %p328 = pneg %p61
        %p329 = pneg %p58
        %s330 = sand.u32 %s26, 1
        %s331 = scalar_lea.sflag [#allocation6], %s330
        %s332 = sand.u32 %s74, 1
        %s333 = scalar_lea.vmem [#allocation5], %s332
        %p334 = pneg %p87
        %p335 = pneg %p84
        %s336 = sand.u32 %s26, 1
        %s337 = scalar_lea.sflag [#allocation6], %s336
        %s338 = sand.u32 %s100, 1
        %s339 = scalar_lea.vmem [#allocation7], %s338
        %p340 = pneg %p113
        %p341 = pneg %p110
        %p342 = pneg %p134
        %p343 = pneg %p131
        %p344 = pneg %p155
        %p345 = pneg %p152
        %p346 = pneg %p183
        %p347 = pneg %p180
        %s348 = sand.u32 %s170, 1
        %s349 = scalar_lea.sflag [#allocation4], %s348
        %s350 = sand.u32 %s170, 1
        %s351 = smul.addr %s350, 96
        %s352 = scalar_lea.vmem [#allocation11], %s351
        %s353 = smul.u32 8, %s31
        %s354 = smul.u32 8, %s31
        %v356 = vld [vmem:[%s294] sm:$0xff]
        %v357 = vld [vmem:[%s294 + $0x8] sm:$0xff]
        %v358 = vld [vmem:[%s294 + $0x10] sm:$0xff]
        %v359 = vld [vmem:[%s294 + $0x18] sm:$0xff]
        %v360 = vld [vmem:[%s294 + $0x20] sm:$0xff]
        %v361 = vld [vmem:[%s294 + $0x28] sm:$0xff]
        %v362 = vld [vmem:[%s294 + $0x30] sm:$0xff]
        %v363 = vld [vmem:[%s294 + $0x38] sm:$0xff]
        %v364 = vld [vmem:[%s302] sm:$0x1]
        %v366 = vlaneseq
        %v367 = vshrl.u32 %v366, 7
        %v368 = vsub.s32 0, %v367
        %v369 = vrot.slane %v364, %v368
        %v371 = vmul.f32 %v356, %v369
        %v372 = vmul.f32 %v357, %v369
        %v373 = vmul.f32 %v358, %v369
        %v374 = vmul.f32 %v359, %v369
        %v375 = vmul.f32 %v360, %v369
        %v376 = vmul.f32 %v361, %v369
        %v377 = vmul.f32 %v362, %v369
        %v378 = vmul.f32 %v363, %v369
        %v379 = vld [vmem:[%s310] sm:$0x1]
        %v381 = vlaneseq
        %v382 = vshrl.u32 %v381, 7
        %v383 = vsub.s32 0, %v382
        %v384 = vrot.slane %v379, %v383
        %v386 = vadd.f32 %v371, %v384
        %v387 = vadd.f32 %v372, %v384
        %v388 = vadd.f32 %v373, %v384
        %v389 = vadd.f32 %v374, %v384
        %v390 = vadd.f32 %v375, %v384
        %v391 = vadd.f32 %v376, %v384
        %v392 = vadd.f32 %v377, %v384
        %v393 = vadd.f32 %v378, %v384
        %v394 = vpack.c.bf16 %v387, %v386
        %v395 = vpack.c.bf16 %v389, %v388
        %v396 = vpack.c.bf16 %v391, %v390
        %v397 = vpack.c.bf16 %v393, %v392
        %v398 = vld [vmem:[#allocation8] sm:$0xff]
        %v399 = vld [vmem:[#allocation8 + $0x8] sm:$0xf]
        %v400 = vld [vmem:[#allocation8 + $0xc] sm:$0xff]
        %v401 = vld [vmem:[#allocation8 + $0x14] sm:$0xf]
        %v402 = vld [vmem:[#allocation8 + $0x18] sm:$0xff]
        %v403 = vld [vmem:[#allocation8 + $0x20] sm:$0xf]
        %v404 = vld [vmem:[#allocation8 + $0x24] sm:$0xff]
        %v405 = vld [vmem:[#allocation8 + $0x2c] sm:$0xf]
        %v406 = vld [vmem:[#allocation8 + $0x30] sm:$0xff]
        %v407 = vld [vmem:[#allocation8 + $0x38] sm:$0xf]
        %v408 = vld [vmem:[#allocation8 + $0x3c] sm:$0xff]
        %v409 = vld [vmem:[#allocation8 + $0x44] sm:$0xf]
        %v410 = vld [vmem:[#allocation8 + $0x48] sm:$0xff]
        %v411 = vld [vmem:[#allocation8 + $0x50] sm:$0xf]
        %v412 = vld [vmem:[#allocation8 + $0x54] sm:$0xff]
        %v413 = vld [vmem:[#allocation8 + $0x5c] sm:$0xf]
        %v414 = vld [vmem:[#allocation8 + $0x60] sm:$0xff]
        %v415 = vld [vmem:[#allocation8 + $0x68] sm:$0xf]
        %v416 = vld [vmem:[#allocation8 + $0x6c] sm:$0xff]
        %v417 = vld [vmem:[#allocation8 + $0x74] sm:$0xf]
        %v418 = vld [vmem:[#allocation8 + $0x78] sm:$0xff]
        %v419 = vld [vmem:[#allocation8 + $0x80] sm:$0xf]
        %v420 = vld [vmem:[#allocation8 + $0x84] sm:$0xff]
        %v421 = vld [vmem:[#allocation8 + $0x8c] sm:$0xf]
        %v422 = vld [vmem:[#allocation8 + $0x90] sm:$0xff]
        %v423 = vld [vmem:[#allocation8 + $0x98] sm:$0xf]
        %v424 = vld [vmem:[#allocation8 + $0x9c] sm:$0xff]
        %v425 = vld [vmem:[#allocation8 + $0xa4] sm:$0xf]
        %v426 = vld [vmem:[#allocation8 + $0xa8] sm:$0xff]
        %v427 = vld [vmem:[#allocation8 + $0xb0] sm:$0xf]
        %v428 = vld [vmem:[#allocation8 + $0xb4] sm:$0xff]
        %v429 = vld [vmem:[#allocation8 + $0xbc] sm:$0xf]
        %v430 = vld [vmem:[#allocation10] sm:$0x7]
        %v432 = vlaneseq
        %v433 = vshrl.u32 %v432, 7
        %v434 = vsub.s32 0, %v433
        %v435 = vrot.slane %v430, %v434
        %v436 = vlaneseq
        %v437 = vshrl.u32 %v436, 7
        %v438 = vsub.s32 1, %v437
        %v439 = vrot.slane %v430, %v438
        %v440 = vlaneseq
        %v441 = vshrl.u32 %v440, 7
        %v442 = vsub.s32 2, %v441
        %v443 = vrot.slane %v430, %v442
        %v479 = vunpack.c.l.b16 %v398
        %v480 = vunpack.c.h.b16 %v398
        %v481 = vunpack.c.l.b16 %v399
        %v482 = vunpack.c.l.b16 %v400
        %v483 = vunpack.c.h.b16 %v400
        %v484 = vunpack.c.l.b16 %v401
        %v485 = vunpack.c.l.b16 %v402
        %v486 = vunpack.c.h.b16 %v402
        %v487 = vunpack.c.l.b16 %v403
        %v488 = vunpack.c.l.b16 %v404
        %v489 = vunpack.c.h.b16 %v404
        %v490 = vunpack.c.l.b16 %v405
        %v491 = vunpack.c.l.b16 %v406
        %v492 = vunpack.c.h.b16 %v406
        %v493 = vunpack.c.l.b16 %v407
        %v494 = vunpack.c.l.b16 %v408
        %v495 = vunpack.c.h.b16 %v408
        %v496 = vunpack.c.l.b16 %v409
        %v497 = vunpack.c.l.b16 %v410
        %v498 = vunpack.c.h.b16 %v410
        %v499 = vunpack.c.l.b16 %v411
        %v500 = vunpack.c.l.b16 %v412
        %v501 = vunpack.c.h.b16 %v412
        %v502 = vunpack.c.l.b16 %v413
        %v503 = vunpack.c.l.b16 %v414
        %v504 = vunpack.c.h.b16 %v414
        %v505 = vunpack.c.l.b16 %v415
        %v506 = vunpack.c.l.b16 %v416
        %v507 = vunpack.c.h.b16 %v416
        %v508 = vunpack.c.l.b16 %v417
        %v509 = vunpack.c.l.b16 %v418
        %v510 = vunpack.c.h.b16 %v418
        %v511 = vunpack.c.l.b16 %v419
        %v512 = vunpack.c.l.b16 %v420
        %v513 = vunpack.c.h.b16 %v420
        %v514 = vunpack.c.l.b16 %v421
        %v515 = vunpack.c.l.b16 %v422
        %v516 = vunpack.c.h.b16 %v422
        %v517 = vunpack.c.l.b16 %v423
        %v518 = vunpack.c.l.b16 %v424
        %v519 = vunpack.c.h.b16 %v424
        %v520 = vunpack.c.l.b16 %v425
        %v521 = vunpack.c.l.b16 %v426
        %v522 = vunpack.c.h.b16 %v426
        %v523 = vunpack.c.l.b16 %v427
        %v524 = vunpack.c.l.b16 %v428
        %v525 = vunpack.c.h.b16 %v428
        %v526 = vunpack.c.l.b16 %v429
        %v527 = vpack.c.b16 %v482, %v479
        %v528 = vpack.c.b16 %v483, %v480
        %v529 = vpack.c.b16 %v484, %v481
        %v530 = vpack.c.b16 %v488, %v485
        %v531 = vpack.c.b16 %v489, %v486
        %v532 = vpack.c.b16 %v490, %v487
        %v533 = vpack.c.b16 %v494, %v491
        %v534 = vpack.c.b16 %v495, %v492
        %v535 = vpack.c.b16 %v496, %v493
        %v536 = vpack.c.b16 %v500, %v497
        %v537 = vpack.c.b16 %v501, %v498
        %v538 = vpack.c.b16 %v502, %v499
        %v539 = vpack.c.b16 %v506, %v503
        %v540 = vpack.c.b16 %v507, %v504
        %v541 = vpack.c.b16 %v508, %v505
        %v542 = vpack.c.b16 %v512, %v509
        %v543 = vpack.c.b16 %v513, %v510
        %v544 = vpack.c.b16 %v514, %v511
        %v545 = vpack.c.b16 %v518, %v515
        %v546 = vpack.c.b16 %v519, %v516
        %v547 = vpack.c.b16 %v520, %v517
        %v548 = vpack.c.b16 %v524, %v521
        %v549 = vpack.c.b16 %v525, %v522
        %v550 = vpack.c.b16 %v526, %v523
        %575 = vmatprep.subr.bf16.mxu0 %v528
        %576 = vmatpush1.bf16.msra.mxu0 %v527
        %577 = vmatprep.subr.bf16.mxu0 %v531
        %578 = vmatpush1.bf16.msra.mxu0 %v530
        %579 = vmatprep.subr.bf16.mxu0 %v534
        %580 = vmatpush1.bf16.msra.mxu0 %v533
        %581 = vmatprep.subr.bf16.mxu0 %v537
        %582 = vmatpush1.bf16.msra.mxu0 %v536
        %583 = vmatprep.subr.bf16.mxu0 %v540
        %584 = vmatpush1.bf16.msra.mxu0 %v539
        %585 = vmatprep.subr.bf16.mxu0 %v543
        %586 = vmatpush1.bf16.msra.mxu0 %v542
        %587 = vmatprep.subr.bf16.mxu0 %v546
        %588 = vmatpush1.bf16.msra.mxu0 %v545
        %589 = vmatprep.subr.bf16.mxu0 %v549
        %590 = vmatpush1.bf16.msra.mxu0 %v548
        %591 = vmatprep.subr.bf16.mxu0 0
        %592 = vmatpush1.bf16.msra.mxu0 0
        %593 = vmatprep.subr.bf16.mxu0 0
        %594 = vmatpush1.bf16.msra.mxu0 0
        %595 = vmatprep.subr.bf16.mxu0 0
        %596 = vmatpush1.bf16.msra.mxu0 0
        %597 = vmatprep.subr.bf16.mxu0 0
        %598 = vmatpush1.bf16.msra.mxu0 0
        %599 = vmatprep.subr.bf16.mxu0 0
        %600 = vmatpush1.bf16.msra.mxu0 0
        %601 = vmatprep.subr.bf16.mxu0 0
        %602 = vmatpush1.bf16.msra.mxu0 0
        %603 = vmatprep.subr.bf16.mxu0 0
        %604 = vmatpush1.bf16.msra.mxu0 0
        %605 = vmatprep.subr.bf16.mxu0 0
        %606 = vmatpush1.bf16.msra.mxu0 0
        %607 = vmatprep.mubr.bf16.mxu0 0
        %608 = vmatmul.mubr.bf16.gmra.mrb[0].mxu0 %v394
        %v609 = vpop.f32.mrb[0].mxu0
        %v610 = vadd.f32 %v435, %v609
        %v611 = vpop.f32.mrb[0].mxu0
        %v612 = vadd.f32 %v439, %v611
        %v613 = vpop.f32.mrb[0].mxu0
        %v614 = vadd.f32 %v435, %v613
        %v615 = vpop.f32.mrb[0].mxu0
        %v616 = vadd.f32 %v439, %v615
        %617 = vmatprep.mubr.bf16.mxu0 0
        %618 = vmatmul.mubr.bf16.gmra.mrb[0].mxu0 %v395
        %v619 = vpop.f32.mrb[0].mxu0
        %v620 = vadd.f32 %v435, %v619
        %v621 = vpop.f32.mrb[0].mxu0
        %v622 = vadd.f32 %v439, %v621
        %v623 = vpop.f32.mrb[0].mxu0
        %v624 = vadd.f32 %v435, %v623
        %v625 = vpop.f32.mrb[0].mxu0
        %v626 = vadd.f32 %v439, %v625
        %627 = vmatprep.mubr.bf16.mxu0 0
        %628 = vmatmul.mubr.bf16.gmra.mrb[0].mxu0 %v396
        %v629 = vpop.f32.mrb[0].mxu0
        %v630 = vadd.f32 %v435, %v629
        %v631 = vpop.f32.mrb[0].mxu0
        %v632 = vadd.f32 %v439, %v631
        %v633 = vpop.f32.mrb[0].mxu0
        %v634 = vadd.f32 %v435, %v633
        %v635 = vpop.f32.mrb[0].mxu0
        %v636 = vadd.f32 %v439, %v635
        %637 = vmatprep.mubr.bf16.mxu0 0
        %638 = vmatmul.mubr.bf16.gmra.mrb[0].mxu0 %v397
        %v639 = vpop.f32.mrb[0].mxu0
        %v640 = vadd.f32 %v435, %v639
        %v641 = vpop.f32.mrb[0].mxu0
        %v642 = vadd.f32 %v439, %v641
        %v643 = vpop.f32.mrb[0].mxu0
        %v644 = vadd.f32 %v435, %v643
        %v645 = vpop.f32.mrb[0].mxu0
        %v646 = vadd.f32 %v439, %v645
        %647 = vdwg.mxu0
        %648 = vmatprep.subr.bf16.mxu0 0
        %649 = vmatpush1.bf16.msra.mxu0 %v529
        %650 = vmatprep.subr.bf16.mxu0 0
        %651 = vmatpush1.bf16.msra.mxu0 %v532
        %652 = vmatprep.subr.bf16.mxu0 0
        %653 = vmatpush1.bf16.msra.mxu0 %v535
        %654 = vmatprep.subr.bf16.mxu0 0
        %655 = vmatpush1.bf16.msra.mxu0 %v538
        %656 = vmatprep.subr.bf16.mxu0 0
        %657 = vmatpush1.bf16.msra.mxu0 %v541
        %658 = vmatprep.subr.bf16.mxu0 0
        %659 = vmatpush1.bf16.msra.mxu0 %v544
        %660 = vmatprep.subr.bf16.mxu0 0
        %661 = vmatpush1.bf16.msra.mxu0 %v547
        %662 = vmatprep.subr.bf16.mxu0 0
        %663 = vmatpush1.bf16.msra.mxu0 %v550
        %664 = vmatprep.subr.bf16.mxu0 0
        %665 = vmatpush1.bf16.msra.mxu0 0
        %666 = vmatprep.subr.bf16.mxu0 0
        %667 = vmatpush1.bf16.msra.mxu0 0
        %668 = vmatprep.subr.bf16.mxu0 0
        %669 = vmatpush1.bf16.msra.mxu0 0
        %670 = vmatprep.subr.bf16.mxu0 0
        %671 = vmatpush1.bf16.msra.mxu0 0
        %672 = vmatprep.subr.bf16.mxu0 0
        %673 = vmatpush1.bf16.msra.mxu0 0
        %674 = vmatprep.subr.bf16.mxu0 0
        %675 = vmatpush1.bf16.msra.mxu0 0
        %676 = vmatprep.subr.bf16.mxu0 0
        %677 = vmatpush1.bf16.msra.mxu0 0
        %678 = vmatprep.subr.bf16.mxu0 0
        %679 = vmatpush1.bf16.msra.mxu0 0
        %680 = vmatprep.mubr.bf16.mxu0 0
        %681 = vmatmul.mubr.bf16.gmra.mrb[0].mxu0 %v394
        %v682 = vpop.f32.mrb[0].mxu0
        %v683 = vadd.f32 %v443, %v682
        %v684 = vpop.f32.mrb[0].mxu0
        %v685 = vpop.f32.mrb[0].mxu0
        %v686 = vadd.f32 %v443, %v685
        %v687 = vpop.f32.mrb[0].mxu0
        %688 = vmatprep.mubr.bf16.mxu0 0
        %689 = vmatmul.mubr.bf16.gmra.mrb[0].mxu0 %v395
        %v690 = vpop.f32.mrb[0].mxu0
        %v691 = vadd.f32 %v443, %v690
        %v692 = vpop.f32.mrb[0].mxu0
        %v693 = vpop.f32.mrb[0].mxu0
        %v694 = vadd.f32 %v443, %v693
        %v695 = vpop.f32.mrb[0].mxu0
        %696 = vmatprep.mubr.bf16.mxu0 0
        %697 = vmatmul.mubr.bf16.gmra.mrb[0].mxu0 %v396
        %v698 = vpop.f32.mrb[0].mxu0
        %v699 = vadd.f32 %v443, %v698
        %v700 = vpop.f32.mrb[0].mxu0
        %v701 = vpop.f32.mrb[0].mxu0
        %v702 = vadd.f32 %v443, %v701
        %v703 = vpop.f32.mrb[0].mxu0
        %704 = vmatprep.mubr.bf16.mxu0 0
        %705 = vmatmul.mubr.bf16.gmra.mrb[0].mxu0 %v397
        %v706 = vpop.f32.mrb[0].mxu0
        %v707 = vadd.f32 %v443, %v706
        %v708 = vpop.f32.mrb[0].mxu0
        %v709 = vpop.f32.mrb[0].mxu0
        %v710 = vadd.f32 %v443, %v709
        %v711 = vpop.f32.mrb[0].mxu0
        %712 = vdwg.mxu0
        %v713 = vpack.c.bf16 %v614, %v610
        %v714 = vpack.c.bf16 %v616, %v612
        %v715 = vpack.c.bf16 %v686, %v683
        %v716 = vpack.c.bf16 %v624, %v620
        %v717 = vpack.c.bf16 %v626, %v622
        %v718 = vpack.c.bf16 %v694, %v691
        %v719 = vpack.c.bf16 %v634, %v630
        %v720 = vpack.c.bf16 %v636, %v632
        %v721 = vpack.c.bf16 %v702, %v699
        %v722 = vpack.c.bf16 %v644, %v640
        %v723 = vpack.c.bf16 %v646, %v642
        %v724 = vpack.c.bf16 %v710, %v707
        %v737 = vunpack.c.l.b16 %v713
        %v738 = vunpack.c.l.b16 %v714
        %v739 = vunpack.c.l.b16 %v715
        %v740 = vunpack.c.h.b16 %v713
        %v741 = vunpack.c.h.b16 %v714
        %v742 = vunpack.c.h.b16 %v715
        %v743 = vunpack.c.l.b16 %v716
        %v744 = vunpack.c.l.b16 %v717
        %v745 = vunpack.c.l.b16 %v718
        %v746 = vunpack.c.h.b16 %v716
        %v747 = vunpack.c.h.b16 %v717
        %v748 = vunpack.c.h.b16 %v718
        %v749 = vunpack.c.l.b16 %v719
        %v750 = vunpack.c.l.b16 %v720
        %v751 = vunpack.c.l.b16 %v721
        %v752 = vunpack.c.h.b16 %v719
        %v753 = vunpack.c.h.b16 %v720
        %v754 = vunpack.c.h.b16 %v721
        %v755 = vunpack.c.l.b16 %v722
        %v756 = vunpack.c.l.b16 %v723
        %v757 = vunpack.c.l.b16 %v724
        %v758 = vunpack.c.h.b16 %v722
        %v759 = vunpack.c.h.b16 %v723
        %v760 = vunpack.c.h.b16 %v724
        %v761 = vpack.c.b16 %v738, %v737
        %v762 = vpack.c.b16 %v739, %v739
        %v763 = vpack.c.b16 %v741, %v740
        %v764 = vpack.c.b16 %v742, %v742
        %v765 = vpack.c.b16 %v744, %v743
        %v766 = vpack.c.b16 %v745, %v745
        %v767 = vpack.c.b16 %v747, %v746
        %v768 = vpack.c.b16 %v748, %v748
        %v769 = vpack.c.b16 %v750, %v749
        %v770 = vpack.c.b16 %v751, %v751
        %v771 = vpack.c.b16 %v753, %v752
        %v772 = vpack.c.b16 %v754, %v754
        %v773 = vpack.c.b16 %v756, %v755
        %v774 = vpack.c.b16 %v757, %v757
        %v775 = vpack.c.b16 %v759, %v758
        %v776 = vpack.c.b16 %v760, %v760
        %793 = vst [vmem:[%s352] sm:$0xff] %v761
        %794 = vst [vmem:[%s352 + $0x8] sm:$0xf] %v762
        %795 = vst [vmem:[%s352 + $0xc] sm:$0xff] %v763
        %796 = vst [vmem:[%s352 + $0x14] sm:$0xf] %v764
        %797 = vst [vmem:[%s352 + $0x18] sm:$0xff] %v765
        %798 = vst [vmem:[%s352 + $0x20] sm:$0xf] %v766
        %799 = vst [vmem:[%s352 + $0x24] sm:$0xff] %v767
        %800 = vst [vmem:[%s352 + $0x2c] sm:$0xf] %v768
        %801 = vst [vmem:[%s352 + $0x30] sm:$0xff] %v769
        %802 = vst [vmem:[%s352 + $0x38] sm:$0xf] %v770
        %803 = vst [vmem:[%s352 + $0x3c] sm:$0xff] %v771
        %804 = vst [vmem:[%s352 + $0x44] sm:$0xf] %v772
        %805 = vst [vmem:[%s352 + $0x48] sm:$0xff] %v773
        %806 = vst [vmem:[%s352 + $0x50] sm:$0xf] %v774
        %807 = vst [vmem:[%s352 + $0x54] sm:$0xff] %v775
        %808 = vst [vmem:[%s352 + $0x5c] sm:$0xf] %v776
        %s809 = sand.u32 %s170, 1
        %s810 = scalar_lea.sflag [#allocation4], %s809
        %s811 = sand.u32 %s170, 1
        %s812 = smul.addr %s811, 96
        %s813 = scalar_lea.vmem [#allocation11], %s812
        // Predicated region
        $region61: #{tpu_custom_call.1} parent=39 // pred_check
          %p814 = pneg %p180
        $region62: #{tpu_custom_call.1} parent=39 // pred_check_branch
          %816 = sbr.rel (%p814) target = $region64
        $region63: #{tpu_custom_call.1} parent=39 // pred_region
          %s817 = smul.u32 8, %s31
          %s819 = ssub.s32 1536, 1536
          %820 = vsyncadd %s810, %s819
          %s821 = smul.addr %s817, 3
          %s822 = smul.addr %s30, 24
          %s823 = sadd.s32 %s821, %s822
          %s824 = smul.addr %s823, 64
          %s825 = scalar_lea.hbm %s5, %s824
          %s826 = sshll.u32 %s813, 4
          %s827 = int_to_ptr.vmem [resolvable:$true] %s826
          %832 = dma.vmem_to_hbm [thread:$0]  %s827, 1536, %s825, %s810, 192, 192, 12
        $region64: #{tpu_custom_call.1} parent=39 // pred_fallthru
          _
      $region40: #{tpu_custom_call.1} parent=5 // pred_fallthru
        _
      %p833 = scmp.le.s32.totalorder 2, %s21
      // Predicated region
      $region65: #{tpu_custom_call.1} parent=5 // pred_check
        %p834 = pneg %p833
      $region66: #{tpu_custom_call.1} parent=5 // pred_check_branch
        %836 = sbr.rel (%p834) target = $region68
      $region67: #{tpu_custom_call.1} parent=5 // pred_region
        %s837 = ssub.s32 %s21, 2
        // Predicated region
        $region69: #{tpu_custom_call.1} parent=67 // pred_check
          %p838 = pneg %p186
        $region70: #{tpu_custom_call.1} parent=67 // pred_check_branch
          %840 = sbr.rel (%p838) target = $region72
        $region71: #{tpu_custom_call.1} parent=67 // pred_region
          %s841 = sand.u32 %s171, 1
          %s842 = scalar_lea.sflag [#allocation4], %s841
          %s843 = sand.u32 %s171, 1
          %s844 = smul.addr %s843, 96
          %s845 = scalar_lea.vmem [#allocation11], %s844
          %846 = dma.done %s842, 1536
        $region72: #{tpu_custom_call.1} parent=67 // pred_fallthru
          _
      $region68: #{tpu_custom_call.1} parent=5 // pred_fallthru
        _
    $region6: #{tpu_custom_call.1} parent=1 // loop_footer
      %s25 = sadd.s32 1, %s21
    $region7: #{tpu_custom_call.1} parent=1 // loop_footer_branch
      %20 = sbr.rel target = $region3
    $region8: #{tpu_custom_call.1} parent=1 // loop_exit
      _
    %847 = vsyncpa [#allocation3], 1
    %s848 = scalar_lea.sflag [#allocation3], 1
    %849 = vsyncpa %s848, 1
    %850 = vsyncpa [#allocation6], 1
    %s851 = scalar_lea.sflag [#allocation6], 1
    %852 = vsyncpa %s851, 1
    %853 = vsyncpa [#allocation9], 1
    %854 = vsyncpa [#allocation4], 1
    %s855 = scalar_lea.sflag [#allocation4], 1
    %856 = vsyncpa %s855, 1

</llo_original>
